<compile_context>
chip_gen: v6e
topology: v6e:2x2x1
jax: 0.10.0
libtpu: 0.0.40
codegen_flags: <defaults>
</compile_context>

<pallas_src>
import jax
import jax.numpy as jnp
from jax.experimental import pallas as pl
from jax.experimental.pallas import tpu as pltpu

_LANE = 128
_SUBLANE = 8
_NUM_CORES = 2                 # leading "parallel" axis (v7x megacore; harmless on 1-TC chips)
_MAX_TILE_ROWS = 4096          # (4096, 128) f32 tile = 2 MiB per buffer
_VMEM_LIMIT = 32 * 1024 * 1024


def _round_up(v, m):
    return ((v + m - 1) // m) * m


def _pack_stream(flat, pad_value):
    """Pack a flat vector into lane/sublane-dense rows, split evenly across
    _NUM_CORES with balanced tiles.  Returns (array2d, tile_rows, tiles_per_core)."""
    numel = flat.shape[0]
    rows_min = _round_up(pl.cdiv(numel, _LANE), _SUBLANE)
    rows_per_core = _round_up(pl.cdiv(rows_min, _NUM_CORES), _SUBLANE)
    tiles_per_core = pl.cdiv(rows_per_core, _MAX_TILE_ROWS)
    tile_rows = _round_up(pl.cdiv(rows_per_core, tiles_per_core), _SUBLANE)
    total_rows = _NUM_CORES * tiles_per_core * tile_rows
    pad = total_rows * _LANE - numel
    if pad:
        # TODO(synk): for misaligned inputs this jnp.pad is a full HBM copy;
        # a ragged-last-block in-kernel mask would avoid it.
        flat = jnp.pad(flat, (0, pad), constant_values=pad_value)
    return flat.reshape(total_rows, _LANE), tile_rows, tiles_per_core


def _make_kernel(n, w_numel, c, num_h_tiles, num_w_tiles):
    inv_n = 1.0 / float(n)
    c_over_w = float(c) / float(w_numel)
    num_inner = max(num_h_tiles, num_w_tiles)

    def kernel(yp_ref, y_ref, w_ref, out_ref, hacc_ref, wacc_ref):
        i = pl.program_id(1)

        @pl.when(i == 0)
        def _init():
            hacc_ref[...] = jnp.zeros_like(hacc_ref)
            wacc_ref[...] = jnp.zeros_like(wacc_ref)

        def _reg():
            # Regularization partial: fold the (tile_rows, 128) block into one
            # vreg-shaped (8, 128) accumulator (pure VPU adds).
            w = w_ref[...].astype(jnp.float32)
            wacc_ref[...] += (w * w).reshape(-1, _SUBLANE, _LANE).sum(axis=0)

        def _hinge():
            # Hinge partial: padded entries were encoded as (2.0, 1.0) so the
            # clamp already zeros them — no mask needed.
            yp = yp_ref[...].astype(jnp.float32)
            yv = y_ref[...].astype(jnp.float32)
            m = jnp.maximum(1.0 - yp * yv, 0.0)
            hacc_ref[...] += m.reshape(-1, _SUBLANE, _LANE).sum(axis=0)

        if num_w_tiles == num_inner:
            _reg()
        else:
            pl.when(i < num_w_tiles)(_reg)

        if num_h_tiles == num_inner:
            _hinge()
        else:
            pl.when(i < num_h_tiles)(_hinge)

        @pl.when(i == num_inner - 1)
        def _finalize():
            partial = (jnp.sum(hacc_ref[...]) * inv_n
                       + jnp.sum(wacc_ref[...]) * c_over_w)
            out_ref[...] = jnp.full(out_ref.shape, partial, out_ref.dtype)

    return kernel, num_inner


def svm_loss(x, y_pred, y, fc_weight, c=0.01):
    """Pallas implementation of SVM_loss.forward.

    `x` is accepted for signature parity with the torch module but unused
    (the torch forward never touches it)."""
    del x

    yp_flat = jnp.reshape(y_pred, (-1,))
    y_flat = jnp.reshape(y, (-1,))
    n = yp_flat.shape[0]
    w_flat = jnp.reshape(fc_weight, (-1,))
    w_numel = w_flat.shape[0]

    # Hinge operands: pad so that padded margins evaluate to max(1-2*1, 0)=0.
    yp2d, h_tile_rows, num_h_tiles = _pack_stream(yp_flat, pad_value=2.0)
    y2d, _, _ = _pack_stream(y_flat, pad_value=1.0)
    # Weight: zero padding contributes 0 to sum(w**2).
    w2d, w_tile_rows, num_w_tiles = _pack_stream(w_flat, pad_value=0.0)

    kernel, num_inner = _make_kernel(n, w_numel, c, num_h_tiles, num_w_tiles)

    def _stream_map(tiles_per_core):
        # Clamp the shorter stream's block index so its block stays constant
        # once exhausted (Pallas skips the redundant DMA); compute is guarded
        # by pl.when in the kernel.
        if tiles_per_core == num_inner:
            return lambda p, i: (p * tiles_per_core + i, 0)
        last = tiles_per_core - 1
        return lambda p, i: (p * tiles_per_core + jnp.minimum(i, last), 0)

    out = pl.pallas_call(
        kernel,
        out_shape=jax.ShapeDtypeStruct((_NUM_CORES, _SUBLANE, _LANE), jnp.float32),
        grid=(_NUM_CORES, num_inner),
        in_specs=[
            pl.BlockSpec((h_tile_rows, _LANE), _stream_map(num_h_tiles)),
            pl.BlockSpec((h_tile_rows, _LANE), _stream_map(num_h_tiles)),
            pl.BlockSpec((w_tile_rows, _LANE), _stream_map(num_w_tiles)),
        ],
        out_specs=pl.BlockSpec((1, _SUBLANE, _LANE), lambda p, i: (p, 0, 0)),
        scratch_shapes=[
            pltpu.VMEM((_SUBLANE, _LANE), jnp.float32),   # hinge accumulator
            pltpu.VMEM((_SUBLANE, _LANE), jnp.float32),   # sum(w*w) accumulator
        ],
        compiler_params=pltpu.CompilerParams(
            dimension_semantics=("parallel", "arbitrary"),
            vmem_limit_bytes=_VMEM_LIMIT,
        ),
    )(yp2d, y2d, w2d)

    # Per-core partial sums (each broadcast over its (8,128) output tile).
    return jnp.sum(out[:, 0, 0])


def _reference(y_pred, y, fc_weight, c=0.01):
    yp = jnp.reshape(y_pred, (-1,)).astype(jnp.float32)
    yv = jnp.reshape(y, (-1,)).astype(jnp.float32)
    hinge = jnp.mean(jnp.maximum(1.0 - yp * yv, 0.0))
    return hinge + c * jnp.mean(fc_weight.astype(jnp.float32) ** 2)


if __name__ == "__main__":
    key = jax.random.PRNGKey(0)
    k1, k2, k3, k4 = jax.random.split(key, 4)

    batch, hidden = 8, 32
    # x is unused by the forward but kept for signature fidelity.
    x = jax.random.normal(k1, (batch, hidden), dtype=jnp.float32)
    # linear-SVM score per sample, shape (N, 1)
    y_pred = jax.random.normal(k2, (batch, 1), dtype=jnp.float32)
    # labels in {-1, +1}, shape (N,)
    y = jnp.where(jax.random.bernoulli(k3, 0.5, (batch,)), 1.0, -1.0).astype(jnp.float32)
    # fc weight of the linear classifier, shape (1, hidden)
    fc_weight = 0.1 * jax.random.normal(k4, (1, hidden), dtype=jnp.float32)

    loss = svm_loss(x, y_pred, y, fc_weight, c=0.01)
    jax.block_until_ready(loss)

    ref = _reference(y_pred, y, fc_weight, c=0.01)
    assert jnp.allclose(loss, ref, atol=1e-5, rtol=1e-5), (loss, ref)

    print("KERNEL_OK")
</pallas_src>

<mosaic_0001>
module attributes {stable_mosaic.version = 11 : i64} {
  func.func @kernel(%arg0: i32, %arg1: i32, %arg2: memref<8x128xf32, #tpu.memory_space<vmem>>, %arg3: memref<8x128xf32, #tpu.memory_space<vmem>>, %arg4: memref<8x128xf32, #tpu.memory_space<vmem>>, %arg5: memref<1x8x128xf32, #tpu.memory_space<vmem>>, %arg6: memref<8x128xf32, #tpu.memory_space<vmem>>, %arg7: memref<8x128xf32, #tpu.memory_space<vmem>>) attributes {dimension_semantics = [#tpu.dimension_semantics<parallel>, #tpu.dimension_semantics<arbitrary>], iteration_bounds = array<i64: 2, 1>, scalar_prefetch = 0 : i64, scratch_operands = 2 : i64, tpu.core_type = #tpu.core_type<tc>, window_params = [{transform_indices = @transform_0, window_bounds = array<i64: 8, 128>}, {transform_indices = @transform_1, window_bounds = array<i64: 8, 128>}, {transform_indices = @transform_2, window_bounds = array<i64: 8, 128>}, {transform_indices = @transform_3, window_bounds = array<i64: 1, 8, 128>}]} {
    %c0_i32 = arith.constant 0 : i32
    %0 = arith.cmpi eq, %arg1, %c0_i32 : i32
    %1 = arith.extui %0 : i1 to i32
    %c0_i32_0 = arith.constant 0 : i32
    %2 = arith.cmpi ne, %1, %c0_i32_0 : i32
    scf.if %2 {
      %cst_19 = arith.constant 0.000000e+00 : f32
      %25 = vector.broadcast %cst_19 : f32 to vector<8x128xf32>
      %c0_20 = arith.constant 0 : index
      %c0_21 = arith.constant 0 : index
      %26 = vector.load %arg6[%c0_20, %c0_21] : memref<8x128xf32, #tpu.memory_space<vmem>>, vector<8x128xf32>
      tpu.vector_store %arg6[%c0_20, %c0_21], %25 {strides = array<i32>} : memref<8x128xf32, #tpu.memory_space<vmem>>, vector<8x128xf32>,
      %cst_22 = arith.constant 0.000000e+00 : f32
      %27 = vector.broadcast %cst_22 : f32 to vector<8x128xf32>
      %c0_23 = arith.constant 0 : index
      %c0_24 = arith.constant 0 : index
      %28 = vector.load %arg7[%c0_23, %c0_24] : memref<8x128xf32, #tpu.memory_space<vmem>>, vector<8x128xf32>
      tpu.vector_store %arg7[%c0_23, %c0_24], %27 {strides = array<i32>} : memref<8x128xf32, #tpu.memory_space<vmem>>, vector<8x128xf32>,
    } else {
    }
    %c0 = arith.constant 0 : index
    %c0_1 = arith.constant 0 : index
    %3 = vector.load %arg4[%c0, %c0_1] : memref<8x128xf32, #tpu.memory_space<vmem>>, vector<8x128xf32>
    %c0_2 = arith.constant 0 : index
    %c0_3 = arith.constant 0 : index
    %4 = vector.load %arg7[%c0_2, %c0_3] : memref<8x128xf32, #tpu.memory_space<vmem>>, vector<8x128xf32>
    %5 = arith.mulf %3, %3 : vector<8x128xf32>
    %6 = vector.shape_cast %5 : vector<8x128xf32> to vector<1x8x128xf32>
    %cst = arith.constant dense<0.000000e+00> : vector<8x128xf32>
    %7 = vector.multi_reduction <add>, %6, %cst [0] : vector<1x8x128xf32> to vector<8x128xf32>
    %8 = arith.addf %4, %7 : vector<8x128xf32>
    %c0_4 = arith.constant 0 : index
    %c0_5 = arith.constant 0 : index
    %9 = vector.load %arg7[%c0_4, %c0_5] : memref<8x128xf32, #tpu.memory_space<vmem>>, vector<8x128xf32>
    tpu.vector_store %arg7[%c0_4, %c0_5], %8 {strides = array<i32>} : memref<8x128xf32, #tpu.memory_space<vmem>>, vector<8x128xf32>,
    %c0_6 = arith.constant 0 : index
    %c0_7 = arith.constant 0 : index
    %10 = vector.load %arg2[%c0_6, %c0_7] : memref<8x128xf32, #tpu.memory_space<vmem>>, vector<8x128xf32>
    %c0_8 = arith.constant 0 : index
    %c0_9 = arith.constant 0 : index
    %11 = vector.load %arg3[%c0_8, %c0_9] : memref<8x128xf32, #tpu.memory_space<vmem>>, vector<8x128xf32>
    %12 = arith.mulf %10, %11 : vector<8x128xf32>
    %cst_10 = arith.constant 1.000000e+00 : f32
    %13 = vector.broadcast %cst_10 : f32 to vector<8x128xf32>
    %14 = arith.subf %13, %12 : vector<8x128xf32>
    %cst_11 = arith.constant 0.000000e+00 : f32
    %15 = vector.broadcast %cst_11 : f32 to vector<8x128xf32>
    %16 = arith.maximumf %14, %15 : vector<8x128xf32>
    %c0_12 = arith.constant 0 : index
    %c0_13 = arith.constant 0 : index
    %17 = vector.load %arg6[%c0_12, %c0_13] : memref<8x128xf32, #tpu.memory_space<vmem>>, vector<8x128xf32>
    %18 = vector.shape_cast %16 : vector<8x128xf32> to vector<1x8x128xf32>
    %cst_14 = arith.constant dense<0.000000e+00> : vector<8x128xf32>
    %19 = vector.multi_reduction <add>, %18, %cst_14 [0] : vector<1x8x128xf32> to vector<8x128xf32>
    %20 = arith.addf %17, %19 : vector<8x128xf32>
    %c0_15 = arith.constant 0 : index
    %c0_16 = arith.constant 0 : index
    %21 = vector.load %arg6[%c0_15, %c0_16] : memref<8x128xf32, #tpu.memory_space<vmem>>, vector<8x128xf32>
    tpu.vector_store %arg6[%c0_15, %c0_16], %20 {strides = array<i32>} : memref<8x128xf32, #tpu.memory_space<vmem>>, vector<8x128xf32>,
    %c0_i32_17 = arith.constant 0 : i32
    %22 = arith.cmpi eq, %arg1, %c0_i32_17 : i32
    %23 = arith.extui %22 : i1 to i32
    %c0_i32_18 = arith.constant 0 : i32
    %24 = arith.cmpi ne, %23, %c0_i32_18 : i32
    scf.if %24 {
      %c0_19 = arith.constant 0 : index
      %c0_20 = arith.constant 0 : index
      %25 = vector.load %arg6[%c0_19, %c0_20] : memref<8x128xf32, #tpu.memory_space<vmem>>, vector<8x128xf32>
      %26 = vector.shape_cast %25 : vector<8x128xf32> to vector<1x8x128xf32>
      %cst_21 = arith.constant dense<0.000000e+00> : vector<1xf32>
      %27 = vector.multi_reduction <add>, %26, %cst_21 [1, 2] : vector<1x8x128xf32> to vector<1xf32>
      %28 = vector.shape_cast %27 : vector<1xf32> to vector<1x1x1xf32>
      %29 = vector.extract %28[0, 0, 0] : f32 from vector<1x1x1xf32>
      %cst_22 = arith.constant 1.250000e-01 : f32
      %30 = arith.mulf %29, %cst_22 : f32
      %c0_23 = arith.constant 0 : index
      %c0_24 = arith.constant 0 : index
      %31 = vector.load %arg7[%c0_23, %c0_24] : memref<8x128xf32, #tpu.memory_space<vmem>>, vector<8x128xf32>
      %32 = vector.shape_cast %31 : vector<8x128xf32> to vector<1x8x128xf32>
      %cst_25 = arith.constant dense<0.000000e+00> : vector<1xf32>
      %33 = vector.multi_reduction <add>, %32, %cst_25 [1, 2] : vector<1x8x128xf32> to vector<1xf32>
      %34 = vector.shape_cast %33 : vector<1xf32> to vector<1x1x1xf32>
      %35 = vector.extract %34[0, 0, 0] : f32 from vector<1x1x1xf32>
      %cst_26 = arith.constant 3.125000e-04 : f32
      %36 = arith.mulf %35, %cst_26 : f32
      %37 = arith.addf %30, %36 : f32
      %38 = vector.broadcast %37 : f32 to vector<1x8x128xf32>
      %c0_27 = arith.constant 0 : index
      %c0_28 = arith.constant 0 : index
      %c0_29 = arith.constant 0 : index
      %39 = vector.load %arg5[%c0_27, %c0_28, %c0_29] : memref<1x8x128xf32, #tpu.memory_space<vmem>>, vector<1x8x128xf32>
      tpu.vector_store %arg5[%c0_27, %c0_28, %c0_29], %38 {strides = array<i32>} : memref<1x8x128xf32, #tpu.memory_space<vmem>>, vector<1x8x128xf32>,
    } else {
    }
    return
  }
  func.func @transform_0(%arg0: i32, %arg1: i32) -> (i32, i32) {
    %c1_i32 = arith.constant 1 : i32
    %0 = arith.muli %arg0, %c1_i32 : i32
    %1 = arith.addi %0, %arg1 : i32
    %c0_i32 = arith.constant 0 : i32
    %c0_i32_0 = arith.constant 0 : i32
    return %1, %c0_i32 : i32, i32
  }
  func.func @transform_1(%arg0: i32, %arg1: i32) -> (i32, i32) {
    %c1_i32 = arith.constant 1 : i32
    %0 = arith.muli %arg0, %c1_i32 : i32
    %1 = arith.addi %0, %arg1 : i32
    %c0_i32 = arith.constant 0 : i32
    %c0_i32_0 = arith.constant 0 : i32
    return %1, %c0_i32 : i32, i32
  }
  func.func @transform_2(%arg0: i32, %arg1: i32) -> (i32, i32) {
    %c1_i32 = arith.constant 1 : i32
    %0 = arith.muli %arg0, %c1_i32 : i32
    %1 = arith.addi %0, %arg1 : i32
    %c0_i32 = arith.constant 0 : i32
    %c0_i32_0 = arith.constant 0 : i32
    return %1, %c0_i32 : i32, i32
  }
  func.func @transform_3(%arg0: i32, %arg1: i32) -> (i32, i32, i32) {
    %c0_i32 = arith.constant 0 : i32
    %c0_i32_0 = arith.constant 0 : i32
    %c0_i32_1 = arith.constant 0 : i32
    return %arg0, %c0_i32, %c0_i32_0 : i32, i32, i32
  }
}

</mosaic_0001>

<llo_original>
// kernel: tpu_custom_call.1
$region0: #{tpu_custom_call.1}
  #allocation0 [shape = 'u32[]', space=smem, size = 0x4, offset = 0x4, fixed_abs, tag = 'smem constant byte address 0x4 - core index']
  #allocation1 [shape = 'u32[144,128]{1,0:T(1,128)}', space=vmem, size = 0x12000, scoped, tag = 'internal scratch']
  #allocation2 [shape = 'f32[8,128]{1,0:T(8,128)}', space=vmem, size = 0x1000, scoped, tag = 'scratch operand']
  #allocation3 [shape = 'f32[8,128]{1,0:T(8,128)}', space=vmem, size = 0x1000, scoped, tag = 'scratch operand']
  %s0 = inlined_call_operand.hbm [shape: f32[16,128], index: 0, kind: input, shape index: {}]
  %s1 = inlined_call_operand.hbm [shape: f32[16,128], index: 1, kind: input, shape index: {}]
  %s2 = inlined_call_operand.hbm [shape: f32[16,128], index: 2, kind: input, shape index: {}]
  %s3 = inlined_call_operand.hbm [shape: f32[2,8,128], index: 3, kind: output, shape index: {}]
  %s4 = sld [smem:[#allocation0]]
  $region65: #{tpu_custom_call.1} parent=0
    _
  %s6 = ssub.s32 1, %s4
  %s7 = scalar_select 0, %s6, %s4
  $region1: #{tpu_custom_call.1} parent=0
    #allocation4 [shape = 'u8[8192]{0}', space=vmem, size = 0x2000, scoped, tag = 'input window, operand 0']
    #allocation5 [shape = 's32[2]{0}', space=sflag, size = 0x8, scoped, tag = 'scoped memory for tpu_custom_call.1']
    #allocation6 [shape = 's32[2]{0}', space=sflag, size = 0x8, scoped, tag = 'scoped memory for tpu_custom_call.1']
    #allocation7 [shape = 'u8[8192]{0}', space=vmem, size = 0x2000, scoped, tag = 'input window, operand 1']
    #allocation8 [shape = 's32[2]{0}', space=sflag, size = 0x8, scoped, tag = 'scoped memory for tpu_custom_call.1']
    #allocation9 [shape = 'u8[8192]{0}', space=vmem, size = 0x2000, scoped, tag = 'input window, operand 2']
    #allocation10 [shape = 'u8[8192]{0}', space=vmem, size = 0x2000, scoped, tag = 'output window, operand 0']
    %8 = vsyncpa [#allocation5], 0
    %s9 = scalar_lea.sflag [#allocation5], 1
    %10 = vsyncpa %s9, 0
    %11 = vsyncpa [#allocation8], 0
    %s12 = scalar_lea.sflag [#allocation8], 1
    %13 = vsyncpa %s12, 0
    %14 = vsyncpa [#allocation6], 0
    %s15 = scalar_lea.sflag [#allocation6], 1
    %16 = vsyncpa %s15, 0
    loop: start=0, step=1, limit=4
    $region2: #{tpu_custom_call.1} parent=1 // loop_pre_header
      _
    $region3: #{tpu_custom_call.1} parent=1 // loop_header
      %s18 = sphi 0, %s22
      %p19 = scmp.ge.s32.totalorder %s18, 4
      %s25 = sphi 0, %s37
      %s26 = sphi 0, %s33
      %s27 = sphi 0, %s25
      %s28 = sphi 0, %s26
      %s29 = sphi 0, %s27
      %s30 = sphi 0, %s28
      %s42 = sphi 0, %s44
      %s45 = sphi 0, %s42
      %s46 = sphi 0, %s45
      %s62 = sphi 0, %s46
      %s70 = sphi 0, %s72
      %s73 = sphi 0, %s70
      %s74 = sphi 0, %s73
      %s90 = sphi 0, %s74
      %s98 = sphi 0, %s100
      %s101 = sphi 0, %s98
      %s102 = sphi 0, %s101
      %s118 = sphi 0, %s102
      %s124 = sphi 0, %s126
      %s127 = sphi 0, %s124
      %s128 = sphi 0, %s127
      %s144 = sphi 0, %s128
    $region4: #{tpu_custom_call.1} parent=1 // loop_header_branch
      %21 = sbr.rel (%p19) target = $region8
    $region5: #{tpu_custom_call.1} parent=1 // loop_body
      %s23 = ssub.s32 %s18, 1
      %s24 = ssub.s32 %s18, 2
      %s31 = sadd.s32 1, %s26
      %p32 = scmp.ge.s32.totalorder %s31, 1
      %s33 = scalar_select %p32, 0, %s31
      %s34 = sadd.s32 1, %s25
      %s35 = scalar_select %p32, %s34, %s25
      %p36 = scmp.ge.s32.totalorder %s35, 2
      %s37 = scalar_select %p36, 0, %s35
      %s38 = sadd.s32 %s25, %s26
      %s39 = sadd.s32 %s37, %s33
      %s40 = ssub.s32 %s38, %s39
      %p41 = scmp.eq.s32.totalorder %s40, 0
      %s43 = sadd.s32 %s42, 1
      %s44 = scalar_select %p41, %s42, %s43
      %p47 = pneg %p41
      %p48 = scmp.eq.s32.totalorder %s18, 1
      %p49 = por %p47, %p48
      %p50 = scmp.ne.s32.totalorder %s42, %s45
      %p51 = scmp.eq.s32.totalorder %s18, 0
      %p52 = por %p50, %p51
      %p53 = scmp.ne.s32.totalorder %s42, %s45
      %p54 = scmp.eq.s32.totalorder %s23, 1
      %p55 = por %p53, %p54
      %p56 = scmp.ne.s32.totalorder %s45, %s46
      %p57 = scmp.eq.s32.totalorder %s23, 0
      %p58 = por %p56, %p57
      %p59 = scmp.ne.s32.totalorder %s45, %s46
      %p60 = scmp.eq.s32.totalorder %s24, 1
      %p61 = por %p59, %p60
      %p63 = scmp.ne.s32.totalorder %s46, %s62
      %p64 = scmp.eq.s32.totalorder %s24, 0
      %p65 = por %p63, %p64
      %s66 = sadd.s32 %s25, %s26
      %s67 = sadd.s32 %s37, %s33
      %s68 = ssub.s32 %s66, %s67
      %p69 = scmp.eq.s32.totalorder %s68, 0
      %s71 = sadd.s32 %s70, 1
      %s72 = scalar_select %p69, %s70, %s71
      %p75 = pneg %p69
      %p76 = scmp.eq.s32.totalorder %s18, 1
      %p77 = por %p75, %p76
      %p78 = scmp.ne.s32.totalorder %s70, %s73
      %p79 = scmp.eq.s32.totalorder %s18, 0
      %p80 = por %p78, %p79
      %p81 = scmp.ne.s32.totalorder %s70, %s73
      %p82 = scmp.eq.s32.totalorder %s23, 1
      %p83 = por %p81, %p82
      %p84 = scmp.ne.s32.totalorder %s73, %s74
      %p85 = scmp.eq.s32.totalorder %s23, 0
      %p86 = por %p84, %p85
      %p87 = scmp.ne.s32.totalorder %s73, %s74
      %p88 = scmp.eq.s32.totalorder %s24, 1
      %p89 = por %p87, %p88
      %p91 = scmp.ne.s32.totalorder %s74, %s90
      %p92 = scmp.eq.s32.totalorder %s24, 0
      %p93 = por %p91, %p92
      %s94 = sadd.s32 %s25, %s26
      %s95 = sadd.s32 %s37, %s33
      %s96 = ssub.s32 %s94, %s95
      %p97 = scmp.eq.s32.totalorder %s96, 0
      %s99 = sadd.s32 %s98, 1
      %s100 = scalar_select %p97, %s98, %s99
      %p103 = pneg %p97
      %p104 = scmp.eq.s32.totalorder %s18, 1
      %p105 = por %p103, %p104
      %p106 = scmp.ne.s32.totalorder %s98, %s101
      %p107 = scmp.eq.s32.totalorder %s18, 0
      %p108 = por %p106, %p107
      %p109 = scmp.ne.s32.totalorder %s98, %s101
      %p110 = scmp.eq.s32.totalorder %s23, 1
      %p111 = por %p109, %p110
      %p112 = scmp.ne.s32.totalorder %s101, %s102
      %p113 = scmp.eq.s32.totalorder %s23, 0
      %p114 = por %p112, %p113
      %p115 = scmp.ne.s32.totalorder %s101, %s102
      %p116 = scmp.eq.s32.totalorder %s24, 1
      %p117 = por %p115, %p116
      %p119 = scmp.ne.s32.totalorder %s102, %s118
      %p120 = scmp.eq.s32.totalorder %s24, 0
      %p121 = por %p119, %p120
      %s122 = ssub.s32 %s25, %s37
      %p123 = scmp.eq.s32.totalorder %s122, 0
      %s125 = sadd.s32 %s124, 1
      %s126 = scalar_select %p123, %s124, %s125
      %p129 = pneg %p123
      %p130 = scmp.eq.s32.totalorder %s18, 1
      %p131 = por %p129, %p130
      %p132 = scmp.ne.s32.totalorder %s124, %s127
      %p133 = scmp.eq.s32.totalorder %s18, 0
      %p134 = por %p132, %p133
      %p135 = scmp.ne.s32.totalorder %s124, %s127
      %p136 = scmp.eq.s32.totalorder %s23, 1
      %p137 = por %p135, %p136
      %p138 = scmp.ne.s32.totalorder %s127, %s128
      %p139 = scmp.eq.s32.totalorder %s23, 0
      %p140 = por %p138, %p139
      %p141 = scmp.ne.s32.totalorder %s127, %s128
      %p142 = scmp.eq.s32.totalorder %s24, 1
      %p143 = por %p141, %p142
      %p145 = scmp.ne.s32.totalorder %s128, %s144
      %p146 = scmp.eq.s32.totalorder %s24, 0
      %p147 = por %p145, %p146
      %p148 = scmp.le.s32.totalorder 1, %s18
      %p149 = scmp.lt.s32.totalorder %s18, 3
      %p150 = pnand %p148, %p149
      %p151 = pneg %p150
      // Predicated region
      $region9: #{tpu_custom_call.1} parent=5 // pred_check
        _
      $region10: #{tpu_custom_call.1} parent=5 // pred_check_branch
        %153 = sbr.rel (%p150) target = $region12
      $region11: #{tpu_custom_call.1} parent=5 // pred_region
        %s154 = ssub.s32 %s18, 1
      $region12: #{tpu_custom_call.1} parent=5 // pred_fallthru
        _
      %p155 = scmp.lt.s32.totalorder %s18, 2
      // Predicated region
      $region13: #{tpu_custom_call.1} parent=5 // pred_check
        %p156 = pneg %p155
      $region14: #{tpu_custom_call.1} parent=5 // pred_check_branch
        %158 = sbr.rel (%p156) target = $region16
      $region15: #{tpu_custom_call.1} parent=5 // pred_region
        // Predicated region
        $region17: #{tpu_custom_call.1} parent=15 // pred_check
          %p159 = pneg %p52
        $region18: #{tpu_custom_call.1} parent=15 // pred_check_branch
          %161 = sbr.rel (%p159) target = $region20
        $region19: #{tpu_custom_call.1} parent=15 // pred_region
          %s162 = sand.u32 %s42, 1
          %s163 = scalar_lea.sflag [#allocation5], %s162
          %s164 = sand.u32 %s42, 1
          %s165 = smul.addr %s164, 8
          %s166 = scalar_lea.vmem [#allocation4], %s165
          %s167 = sadd.s32 %s25, %s26
          %s169 = ssub.s32 128, 128
          %170 = vsyncadd %s163, %s169
          %s171 = smul.addr %s167, 128
          %s172 = scalar_lea.hbm %s0, %s171
          %s174 = sshll.u32 %s166, 4
          %s175 = int_to_ptr.vmem [resolvable:$true] %s174
          %177 = dma.hbm_to_vmem [thread:$0]  %s172, 128, %s175, %s163
        $region20: #{tpu_custom_call.1} parent=15 // pred_fallthru
          _
        // Predicated region
        $region21: #{tpu_custom_call.1} parent=15 // pred_check
          %p178 = pneg %p80
        $region22: #{tpu_custom_call.1} parent=15 // pred_check_branch
          %180 = sbr.rel (%p178) target = $region24
        $region23: #{tpu_custom_call.1} parent=15 // pred_region
          %s181 = sand.u32 %s18, 1
          %s182 = scalar_lea.sflag [#allocation8], %s181
          %s183 = sand.u32 %s70, 1
          %s184 = smul.addr %s183, 8
          %s185 = scalar_lea.vmem [#allocation7], %s184
          %s186 = sadd.s32 %s25, %s26
          %s188 = ssub.s32 128, 128
          %189 = vsyncadd %s182, %s188
          %s190 = smul.addr %s186, 128
          %s191 = scalar_lea.hbm %s1, %s190
          %s193 = sshll.u32 %s185, 4
          %s194 = int_to_ptr.vmem [resolvable:$true] %s193
          %196 = dma.hbm_to_vmem [thread:$0]  %s191, 128, %s194, %s182
        $region24: #{tpu_custom_call.1} parent=15 // pred_fallthru
          _
        // Predicated region
        $region25: #{tpu_custom_call.1} parent=15 // pred_check
          %p197 = pneg %p108
        $region26: #{tpu_custom_call.1} parent=15 // pred_check_branch
          %199 = sbr.rel (%p197) target = $region28
        $region27: #{tpu_custom_call.1} parent=15 // pred_region
          %s200 = sand.u32 %s18, 1
          %s201 = scalar_lea.sflag [#allocation8], %s200
          %s202 = sand.u32 %s98, 1
          %s203 = smul.addr %s202, 8
          %s204 = scalar_lea.vmem [#allocation9], %s203
          %s205 = sadd.s32 %s25, %s26
          %s207 = ssub.s32 128, 128
          %208 = vsyncadd %s201, %s207
          %s209 = smul.addr %s205, 128
          %s210 = scalar_lea.hbm %s2, %s209
          %s212 = sshll.u32 %s204, 4
          %s213 = int_to_ptr.vmem [resolvable:$true] %s212
          %215 = dma.hbm_to_vmem [thread:$0]  %s210, 128, %s213, %s201
        $region28: #{tpu_custom_call.1} parent=15 // pred_fallthru
          _
      $region16: #{tpu_custom_call.1} parent=5 // pred_fallthru
        _
      %p216 = scmp.le.s32.totalorder 1, %s18
      %p217 = scmp.lt.s32.totalorder %s18, 3
      %p218 = pnand %p216, %p217
      %p219 = pneg %p218
      // Predicated region
      $region29: #{tpu_custom_call.1} parent=5 // pred_check
        _
      $region30: #{tpu_custom_call.1} parent=5 // pred_check_branch
        %221 = sbr.rel (%p218) target = $region32
      $region31: #{tpu_custom_call.1} parent=5 // pred_region
        %s222 = ssub.s32 %s18, 1
        %s223 = sand.u32 %s45, 1
        %s224 = scalar_lea.sflag [#allocation5], %s223
        %s225 = sand.u32 %s45, 1
        %s226 = smul.addr %s225, 8
        %s227 = scalar_lea.vmem [#allocation4], %s226
        // Predicated region
        $region33: #{tpu_custom_call.1} parent=31 // pred_check
          %p228 = pneg %p58
        $region34: #{tpu_custom_call.1} parent=31 // pred_check_branch
          %230 = sbr.rel (%p228) target = $region36
        $region35: #{tpu_custom_call.1} parent=31 // pred_region
          %231 = dma.done %s224, 128
        $region36: #{tpu_custom_call.1} parent=31 // pred_fallthru
          _
        %s232 = sand.u32 %s23, 1
        %s233 = scalar_lea.sflag [#allocation8], %s232
        %s234 = sand.u32 %s73, 1
        %s235 = smul.addr %s234, 8
        %s236 = scalar_lea.vmem [#allocation7], %s235
        // Predicated region
        $region37: #{tpu_custom_call.1} parent=31 // pred_check
          %p237 = pneg %p86
        $region38: #{tpu_custom_call.1} parent=31 // pred_check_branch
          %239 = sbr.rel (%p237) target = $region40
        $region39: #{tpu_custom_call.1} parent=31 // pred_region
          %240 = dma.done %s233, 128
        $region40: #{tpu_custom_call.1} parent=31 // pred_fallthru
          _
        %s241 = sand.u32 %s23, 1
        %s242 = scalar_lea.sflag [#allocation8], %s241
        %s243 = sand.u32 %s101, 1
        %s244 = smul.addr %s243, 8
        %s245 = scalar_lea.vmem [#allocation9], %s244
        // Predicated region
        $region41: #{tpu_custom_call.1} parent=31 // pred_check
          %p246 = pneg %p114
        $region42: #{tpu_custom_call.1} parent=31 // pred_check_branch
          %248 = sbr.rel (%p246) target = $region44
        $region43: #{tpu_custom_call.1} parent=31 // pred_region
          %249 = dma.done %s242, 128
        $region44: #{tpu_custom_call.1} parent=31 // pred_fallthru
          _
        %s250 = sand.u32 %s45, 1
        %s251 = scalar_lea.sflag [#allocation5], %s250
        %s252 = sand.u32 %s45, 1
        %s253 = smul.addr %s252, 8
        %s254 = scalar_lea.vmem [#allocation4], %s253
        %p255 = pneg %p58
        %p256 = pneg %p55
        %s257 = sand.u32 %s23, 1
        %s258 = scalar_lea.sflag [#allocation8], %s257
        %s259 = sand.u32 %s73, 1
        %s260 = smul.addr %s259, 8
        %s261 = scalar_lea.vmem [#allocation7], %s260
        %p262 = pneg %p86
        %p263 = pneg %p83
        %s264 = sand.u32 %s23, 1
        %s265 = scalar_lea.sflag [#allocation8], %s264
        %s266 = sand.u32 %s101, 1
        %s267 = smul.addr %s266, 8
        %s268 = scalar_lea.vmem [#allocation9], %s267
        %p269 = pneg %p114
        %p270 = pneg %p111
        %p271 = pneg %p140
        %p272 = pneg %p137
        %s273 = sand.u32 %s127, 1
        %s274 = scalar_lea.sflag [#allocation6], %s273
        %s275 = sand.u32 %s127, 1
        %s276 = smul.addr %s275, 8
        %s277 = scalar_lea.vmem [#allocation10], %s276
        %s278 = sadd.s32 %s27, %s28
        %s279 = sadd.s32 %s27, %s28
        %s280 = sadd.s32 %s27, %s28
        %p281 = scmp.eq.s32.totalorder %s28, 0
        // Predicated region
        $region45: #{tpu_custom_call.1} parent=31 // pred_check
          %p282 = pneg %p281
        $region46: #{tpu_custom_call.1} parent=31 // pred_check_branch
          %284 = sbr.rel (%p282) target = $region48
        $region47: #{tpu_custom_call.1} parent=31 // pred_region
          %285 = vst [vmem:[#allocation2] sm:$0xff] 0.0
          %286 = vst [vmem:[#allocation3] sm:$0xff] 0.0
        $region48: #{tpu_custom_call.1} parent=31 // pred_fallthru
          _
        %v287 = vld [vmem:[%s245] sm:$0xff]
        %v288 = vld [vmem:[#allocation3] sm:$0xff]
        %v289 = vmul.f32 %v287, %v287
        %v290 = vadd.f32 %v289, 0.0
        %v291 = vadd.f32 %v288, %v290
        %292 = vst [vmem:[#allocation3] sm:$0xff] %v291
        %v293 = vld [vmem:[%s227] sm:$0xff]
        %v294 = vld [vmem:[%s236] sm:$0xff]
        %v295 = vmul.f32 %v293, %v294
        %v296 = vsub.f32 1.0, %v295
        %v297 = vmax.f32 %v296, 0.0
        %v298 = vld [vmem:[#allocation2] sm:$0xff]
        %v299 = vadd.f32 %v297, 0.0
        %v300 = vadd.f32 %v298, %v299
        %301 = vst [vmem:[#allocation2] sm:$0xff] %v300
        // Predicated region
        $region49: #{tpu_custom_call.1} parent=31 // pred_check
          %p302 = pneg %p281
        $region50: #{tpu_custom_call.1} parent=31 // pred_check_branch
          %304 = sbr.rel (%p302) target = $region52
        $region51: #{tpu_custom_call.1} parent=31 // pred_region
          %v305 = vld [vmem:[#allocation2] sm:$0xff]
          %306 = vadd.xlane.f32.xlu0 %v305
          %v307 = vpop.xlane.xlu0 %306
          %v308 = vrot.slane %v307, 4
          %v309 = vadd.f32 %v307, %v308
          %v310 = vrot.slane %v309, 2
          %v311 = vadd.f32 %v309, %v310
          %v312 = vrot.slane %v311, 1
          %v313 = vadd.f32 %v311, %v312
          %s314 = vtos %v313
          %s315 = smul.f32 %s314, 0.125
          %v316 = vld [vmem:[#allocation3] sm:$0xff]
          %317 = vadd.xlane.f32.xlu0 %v316
          %v318 = vpop.xlane.xlu0 %317
          %v319 = vrot.slane %v318, 4
          %v320 = vadd.f32 %v318, %v319
          %v321 = vrot.slane %v320, 2
          %v322 = vadd.f32 %v320, %v321
          %v323 = vrot.slane %v322, 1
          %v324 = vadd.f32 %v322, %v323
          %s325 = vtos %v324
          %s326 = smul.f32 %s325, 0.0003125
          %s327 = sadd.f32 %s315, %s326
          %v328 = vstv %s327
          %329 = vst [vmem:[%s277] sm:$0xff] %v328
        $region52: #{tpu_custom_call.1} parent=31 // pred_fallthru
          _
        %s330 = sand.u32 %s127, 1
        %s331 = scalar_lea.sflag [#allocation6], %s330
        %s332 = sand.u32 %s127, 1
        %s333 = smul.addr %s332, 8
        %s334 = scalar_lea.vmem [#allocation10], %s333
        // Predicated region
        $region53: #{tpu_custom_call.1} parent=31 // pred_check
          %p335 = pneg %p137
        $region54: #{tpu_custom_call.1} parent=31 // pred_check_branch
          %337 = sbr.rel (%p335) target = $region56
        $region55: #{tpu_custom_call.1} parent=31 // pred_region
          %s339 = ssub.s32 128, 128
          %340 = vsyncadd %s331, %s339
          %s341 = smul.addr %s27, 128
          %s342 = scalar_lea.hbm %s3, %s341
          %s344 = sshll.u32 %s334, 4
          %s345 = int_to_ptr.vmem [resolvable:$true] %s344
          %347 = dma.vmem_to_hbm [thread:$0]  %s345, 128, %s342, %s331
        $region56: #{tpu_custom_call.1} parent=31 // pred_fallthru
          _
      $region32: #{tpu_custom_call.1} parent=5 // pred_fallthru
        _
      %p348 = scmp.le.s32.totalorder 2, %s18
      // Predicated region
      $region57: #{tpu_custom_call.1} parent=5 // pred_check
        %p349 = pneg %p348
      $region58: #{tpu_custom_call.1} parent=5 // pred_check_branch
        %351 = sbr.rel (%p349) target = $region60
      $region59: #{tpu_custom_call.1} parent=5 // pred_region
        %s352 = ssub.s32 %s18, 2
        // Predicated region
        $region61: #{tpu_custom_call.1} parent=59 // pred_check
          %p353 = pneg %p143
        $region62: #{tpu_custom_call.1} parent=59 // pred_check_branch
          %355 = sbr.rel (%p353) target = $region64
        $region63: #{tpu_custom_call.1} parent=59 // pred_region
          %s356 = sand.u32 %s128, 1
          %s357 = scalar_lea.sflag [#allocation6], %s356
          %s358 = sand.u32 %s128, 1
          %s359 = smul.addr %s358, 8
          %s360 = scalar_lea.vmem [#allocation10], %s359
          %361 = dma.done %s357, 128
        $region64: #{tpu_custom_call.1} parent=59 // pred_fallthru
          _
      $region60: #{tpu_custom_call.1} parent=5 // pred_fallthru
        _
    $region6: #{tpu_custom_call.1} parent=1 // loop_footer
      %s22 = sadd.s32 1, %s18
    $region7: #{tpu_custom_call.1} parent=1 // loop_footer_branch
      %17 = sbr.rel target = $region3
    $region8: #{tpu_custom_call.1} parent=1 // loop_exit
      _
    %362 = vsyncpa [#allocation5], 1
    %s363 = scalar_lea.sflag [#allocation5], 1
    %364 = vsyncpa %s363, 1
    %365 = vsyncpa [#allocation8], 1
    %s366 = scalar_lea.sflag [#allocation8], 1
    %367 = vsyncpa %s366, 1
    %368 = vsyncpa [#allocation6], 1
    %s369 = scalar_lea.sflag [#allocation6], 1
    %370 = vsyncpa %s369, 1

</llo_original>
